<compile_context>
chip_gen: v7x
topology: tpu7x:2x2x1
jax: 0.10.0
libtpu: 0.0.40
codegen_flags: <defaults>
</compile_context>

<pallas_src>
import functools

import jax
import jax.numpy as jnp
from jax import lax
from jax.experimental import pallas as pl
from jax.experimental.pallas import tpu as pltpu


# ---------------------------------------------------------------------------
# hardware / tiling helpers
# ---------------------------------------------------------------------------
def _vmem_capacity_bytes():
    try:
        cap = int(pltpu.get_tpu_info().vmem_capacity_bytes)
        if cap > 0:
            return cap
    except Exception:
        pass
    return 64 * 1024 * 1024          # conservative (v7x-sized) default


def _vmem_limit_bytes(per_step_io_bytes, cap):
    # double-buffered in/out blocks + f32 in-kernel temporaries + headroom,
    # capped well below physical VMEM (~0.6*cap => ~38 MiB on v7x, ~77 MiB on
    # v5e/v6e) instead of a blanket constant.
    need = 4 * per_step_io_bytes + (16 << 20)
    return int(min(max(32 << 20, min(need, cap * 3 // 5)), cap * 9 // 10))


def _sublane_multiple(dtype):
    # dtype-aware sublane packing: f32 -> 8, bf16 -> 16, int8/fp8 -> 32
    return {4: 8, 2: 16, 1: 32}.get(jnp.dtype(dtype).itemsize, 8)


def _channel_tile_candidates(n_chan, dtype, max_tc=None):
    s = _sublane_multiple(dtype)
    hi = n_chan if max_tc is None else min(n_chan, max_tc)
    cands = [t for t in range(s, hi + 1, s) if n_chan % t == 0]
    if not cands:
        cands = [n_chan]             # awkward / tiny channel count: full extent
    return sorted(cands, reverse=True)


def _pick_fused_channel_tile(n_chan, dtype, n_batch, length, strip_limit_f32):
    """Largest channel strip (preferring >=2 strips for megacore) whose
    full (N, tc, L) f32 working set fits the fused-path budget."""
    cands = _channel_tile_candidates(n_chan, dtype)
    ordered = ([t for t in cands if n_chan // t >= 2]
               + [t for t in cands if n_chan // t < 2])
    for t in ordered:
        if n_batch * t * length * 4 <= strip_limit_f32:
            return t
    return None


def _pick_channel_tile(n_chan, dtype):
    cands = _channel_tile_candidates(n_chan, dtype, max_tc=256)
    multi = [t for t in cands if n_chan // t >= 2]   # >=2 strips for 2 TCs
    return (multi or cands)[0]


def _pick_lane_tile(length, tc, itemsize, budget):
    """Lane tile: multiple of 128 within the per-block budget, preferring exact
    divisors of L; otherwise full extent (small L) or a masked cdiv tiling."""
    max_lanes = max((budget // (tc * itemsize)) // 128 * 128, 128)
    start = min(max_lanes, (length // 128) * 128)
    for t in range(start, 0, -128):
        if length % t == 0:
            return t, False
    if length <= 128 or length * tc * itemsize <= budget:
        return length, False         # full-extent lane block (always legal)
    return max_lanes, True           # bounded lane-dense tile + masked edge


def _pick_batch_tile(n_batch, tc, tl, itemsize, budget):
    """Grow the leading block dim so each DMA moves a few MiB when L is small."""
    per = tc * tl * itemsize
    best = 1
    for b in range(1, n_batch + 1):
        if n_batch % b == 0 and b * per <= budget:
            best = b
    return best


# ---------------------------------------------------------------------------
# dropout keep-mask (stateless integer hash, int32-only ops)
# ---------------------------------------------------------------------------
_HASH_C1 = -1640531535     # 0x9E3779B1 as int32
_HASH_C2 = -2048144777     # 0x85EBCA77 as int32
_HASH_M1 = 2146121005      # 0x7FEB352D
_HASH_M2 = -2073254261     # 0x846CA68B as int32
_SIGN_BIT = -2147483648    # 0x80000000 as int32


def _lrs(h, k):
    """Logical right shift of an int32 array (arithmetic shift + top-bit mask)."""
    return (h >> k) & ((1 << (32 - k)) - 1)


def _keep_mask(shape, seed_i32, n_off, c_off, l_off, n_chan, length,
               dropout_ratio):
    """Per-element Bernoulli(1-p) keep mask from a stateless int32 hash of the
    global element index: tiling-independent, lowers on TPU and in interpret
    mode (no TPU-only PRNG primitives).
    TODO(synk): reproduces torch dropout's distribution, not its RNG stream."""
    ni = lax.broadcasted_iota(jnp.int32, shape, 0) + n_off
    ci = lax.broadcasted_iota(jnp.int32, shape, 1) + c_off
    li = lax.broadcasted_iota(jnp.int32, shape, 2) + l_off
    idx = (ni * n_chan + ci) * length + li
    h = idx * _HASH_C1 + seed_i32 * _HASH_C2
    h = h ^ _lrs(h, 16)
    h = h * _HASH_M1
    h = h ^ _lrs(h, 15)
    h = h * _HASH_M2
    h = h ^ _lrs(h, 16)
    # keep iff uniform-uint32(h) >= p * 2^32  (sign-flip unsigned compare)
    t_u = min(int(dropout_ratio * 4294967296.0), 0xFFFFFFFF)
    t_b = t_u ^ 0x80000000
    t_signed = t_b - 0x100000000 if t_b >= 0x80000000 else t_b
    return (h ^ _SIGN_BIT) >= t_signed


# ---------------------------------------------------------------------------
# kernels
# ---------------------------------------------------------------------------
def _fused_kernel(seed_ref, x_ref, g_ref, b_ref, o_ref, *,
                  count, eps, dropout_ratio, do_bn, n_chan, length):
    """Single-pass BN + ReLU (+dropout) on a VMEM-resident (N, tc, L) strip."""
    x = x_ref[...].astype(jnp.float32)                          # (N, tc, L)
    tc = x.shape[1]
    if do_bn:
        s1 = jnp.sum(jnp.sum(x, axis=0), axis=-1, keepdims=True)      # (tc, 1)
        s2 = jnp.sum(jnp.sum(x * x, axis=0), axis=-1, keepdims=True)
        inv_n = 1.0 / count
        mean = s1 * inv_n
        # TODO(synk): one-pass E[x^2]-mean^2 in f32; switch to a shifted /
        # Welford-style accumulation if tighter BN numerics are ever required.
        var = jnp.maximum(s2 * inv_n - mean * mean, 0.0)
        scale = g_ref[...] * lax.rsqrt(var + eps)                # (tc, 1)
        shift = b_ref[...] - mean * scale
        if dropout_ratio > 0.0:
            inv_keep = 1.0 / (1.0 - dropout_ratio)   # >0, commutes with ReLU
            scale = scale * inv_keep
            shift = shift * inv_keep
        y = jnp.maximum(x * scale + shift, 0.0)
    else:
        y = jnp.maximum(x, 0.0)
        if dropout_ratio > 0.0:
            y = y * (1.0 / (1.0 - dropout_ratio))
    if dropout_ratio > 0.0:
        keep = _keep_mask(y.shape, seed_ref[0], 0, pl.program_id(0) * tc, 0,
                          n_chan, length, dropout_ratio)
        y = jnp.where(keep, y, 0.0)
    o_ref[...] = y.astype(o_ref.dtype)


def _stats_kernel(x_ref, s1_ref, s2_ref, *, l_total, needs_mask):
    """Accumulate lane-dense (tc, 128) per-channel sum / sum-of-squares."""
    n = pl.program_id(1)
    l = pl.program_id(2)

    @pl.when((n == 0) & (l == 0))
    def _():
        s1_ref[...] = jnp.zeros_like(s1_ref)
        s2_ref[...] = jnp.zeros_like(s2_ref)

    x = x_ref[...].astype(jnp.float32)                           # (bn, tc, tl)
    bn, tc, tl = x.shape
    if needs_mask:                                               # cdiv edge block
        lane = lax.broadcasted_iota(jnp.int32, x.shape, 2) + l * tl
        x = jnp.where(lane < l_total, x, 0.0)

    if tl % 128 == 0:
        # plain VPU adds into a lane-dense accumulator; the single cross-lane
        # reduce happens later (in the apply kernel), stores are unmasked.
        a1 = jnp.zeros((tc, 128), jnp.float32)
        a2 = jnp.zeros((tc, 128), jnp.float32)
        for k in range(tl // 128):
            chunk = x[:, :, k * 128:(k + 1) * 128]               # (bn, tc, 128)
            a1 = a1 + jnp.sum(chunk, axis=0)
            a2 = a2 + jnp.sum(chunk * chunk, axis=0)
    else:
        # small / awkward full-extent lane block: reduce fully, park in lane 0
        p1 = jnp.sum(jnp.sum(x, axis=0), axis=-1, keepdims=True)        # (tc, 1)
        p2 = jnp.sum(jnp.sum(x * x, axis=0), axis=-1, keepdims=True)
        lane0 = lax.broadcasted_iota(jnp.int32, (tc, 128), 1) == 0
        a1 = jnp.where(lane0, p1, 0.0)
        a2 = jnp.where(lane0, p2, 0.0)

    s1_ref[...] += a1
    s2_ref[...] += a2


def _apply_kernel(seed_ref, x_ref, s1_ref, s2_ref, g_ref, b_ref, o_ref, *,
                  count, eps, dropout_ratio, do_bn, n_chan, length):
    """y = relu(x * scale + shift) [dropout]; scale/shift derived in-kernel."""
    x = x_ref[...].astype(jnp.float32)                           # (bn, tc, tl)
    bn, tc, tl = x.shape
    if do_bn:
        s1 = jnp.sum(s1_ref[...], axis=-1, keepdims=True)        # (tc, 1)
        s2 = jnp.sum(s2_ref[...], axis=-1, keepdims=True)
        inv_n = 1.0 / count
        mean = s1 * inv_n
        var = jnp.maximum(s2 * inv_n - mean * mean, 0.0)
        scale = g_ref[...] * lax.rsqrt(var + eps)                # EUP rsqrt
        shift = b_ref[...] - mean * scale
        if dropout_ratio > 0.0:
            inv_keep = 1.0 / (1.0 - dropout_ratio)
            scale = scale * inv_keep
            shift = shift * inv_keep
        y = jnp.maximum(x * scale + shift, 0.0)
    else:
        y = jnp.maximum(x, 0.0)
        if dropout_ratio > 0.0:
            y = y * (1.0 / (1.0 - dropout_ratio))
    if dropout_ratio > 0.0:
        keep = _keep_mask(y.shape, seed_ref[0],
                          pl.program_id(1) * bn, pl.program_id(0) * tc,
                          pl.program_id(2) * tl, n_chan, length, dropout_ratio)
        y = jnp.where(keep, y, 0.0)
    o_ref[...] = y.astype(o_ref.dtype)


# ---------------------------------------------------------------------------
# wrapper
# ---------------------------------------------------------------------------
def regularization_layer(x, gamma, beta, *, do_batch_norm=True,
                         dropout_ratio=0.0, eps=1e-5, seed=0):
    """Forward pass of RegularizationLayer (training mode).

    x           : (N, C, H, W) for ConvMode.D2, (N, C, L) or (N, C) for D1.
    gamma, beta : (C,) affine BatchNorm parameters (ignored if not do_batch_norm).
    """
    # TODO(synk): only training-mode BatchNorm (batch statistics, biased var);
    # eval-mode running statistics / momentum updates are not implemented.
    orig_shape = x.shape
    n_batch, n_chan = int(orig_shape[0]), int(orig_shape[1])
    length = 1
    for d in orig_shape[2:]:
        length *= int(d)
    x3 = x.reshape(n_batch, n_chan, length)  # trailing-dim reshape: no transpose

    itemsize = jnp.dtype(x.dtype).itemsize
    cap = _vmem_capacity_bytes()
    count = float(n_batch * length)
    gamma2 = jnp.asarray(gamma, jnp.float32).reshape(n_chan, 1)
    beta2 = jnp.asarray(beta, jnp.float32).reshape(n_chan, 1)
    seed_arr = jnp.asarray([seed], dtype=jnp.int32)

    # ---------------------------- fused single pass --------------------------
    # Whole (N, tc, L) channel strip resident in VMEM: stats + normalize +
    # ReLU (+dropout) from the same data -> 2x HBM traffic instead of 3x.
    fused_tc = _pick_fused_channel_tile(n_chan, x.dtype, n_batch, length,
                                        strip_limit_f32=cap // 16)
    if fused_tc is not None:
        nc = n_chan // fused_tc
        io_bytes = 2 * n_batch * fused_tc * length * max(itemsize, 4)
        kernel = functools.partial(
            _fused_kernel, count=count, eps=float(eps),
            dropout_ratio=float(dropout_ratio), do_bn=bool(do_batch_norm),
            n_chan=n_chan, length=length)
        out3 = pl.pallas_call(
            kernel,
            out_shape=jax.ShapeDtypeStruct((n_batch, n_chan, length), x.dtype),
            grid_spec=pltpu.PrefetchScalarGridSpec(
                num_scalar_prefetch=1,                 # dropout seed -> SMEM
                grid=(nc,),
                in_specs=[
                    pl.BlockSpec((n_batch, fused_tc, length),
                                 lambda c, s: (0, c, 0)),
                    pl.BlockSpec((fused_tc, 1), lambda c, s: (c, 0)),
                    pl.BlockSpec((fused_tc, 1), lambda c, s: (c, 0)),
                ],
                out_specs=pl.BlockSpec((n_batch, fused_tc, length),
                                       lambda c, s: (0, c, 0)),
            ),
            compiler_params=pltpu.CompilerParams(
                dimension_semantics=("parallel",),
                vmem_limit_bytes=_vmem_limit_bytes(io_bytes, cap)),
            cost_estimate=pl.CostEstimate(
                flops=6 * x3.size, transcendentals=0,
                bytes_accessed=2 * x3.size * itemsize + 8 * n_chan),
        )(seed_arr, x3, gamma2, beta2)
        return out3.reshape(orig_shape)

    # ------------------------- two-sweep fallback ----------------------------
    tc = _pick_channel_tile(n_chan, x.dtype)
    block_budget = max(cap // 16, 2 << 20)
    tl, needs_mask = _pick_lane_tile(length, tc, itemsize, block_budget)
    bn = _pick_batch_tile(n_batch, tc, tl, itemsize, block_budget)
    nc = n_chan // tc
    nb = n_batch // bn
    nl = pl.cdiv(length, tl)

    if do_batch_norm:
        stats_kernel = functools.partial(_stats_kernel, l_total=length,
                                         needs_mask=needs_mask)
        s1, s2 = pl.pallas_call(
            stats_kernel,
            out_shape=(jax.ShapeDtypeStruct((n_chan, 128), jnp.float32),
                       jax.ShapeDtypeStruct((n_chan, 128), jnp.float32)),
            grid_spec=pltpu.PrefetchScalarGridSpec(
                num_scalar_prefetch=0,
                grid=(nc, nb, nl),
                in_specs=[pl.BlockSpec((bn, tc, tl),
                                       lambda c, n, l: (n, c, l))],
                out_specs=(pl.BlockSpec((tc, 128), lambda c, n, l: (c, 0)),
                           pl.BlockSpec((tc, 128), lambda c, n, l: (c, 0))),
            ),
            compiler_params=pltpu.CompilerParams(
                dimension_semantics=("parallel", "arbitrary", "arbitrary"),
                vmem_limit_bytes=_vmem_limit_bytes(bn * tc * tl * itemsize,
                                                   cap)),
            cost_estimate=pl.CostEstimate(
                flops=3 * x3.size, transcendentals=0,
                bytes_accessed=x3.size * itemsize + 1024 * n_chan),
        )(x3)
    else:
        s1 = jnp.zeros((n_chan, 128), jnp.float32)
        s2 = jnp.zeros((n_chan, 128), jnp.float32)

    apply_kernel = functools.partial(
        _apply_kernel, count=count, eps=float(eps),
        dropout_ratio=float(dropout_ratio), do_bn=bool(do_batch_norm),
        n_chan=n_chan, length=length)
    out3 = pl.pallas_call(
        apply_kernel,
        out_shape=jax.ShapeDtypeStruct((n_batch, n_chan, length), x.dtype),
        grid_spec=pltpu.PrefetchScalarGridSpec(
            num_scalar_prefetch=1,                     # dropout seed -> SMEM
            grid=(nc, nb, nl),
            in_specs=[
                pl.BlockSpec((bn, tc, tl), lambda c, n, l, s: (n, c, l)),
                pl.BlockSpec((tc, 128), lambda c, n, l, s: (c, 0)),
                pl.BlockSpec((tc, 128), lambda c, n, l, s: (c, 0)),
                pl.BlockSpec((tc, 1), lambda c, n, l, s: (c, 0)),
                pl.BlockSpec((tc, 1), lambda c, n, l, s: (c, 0)),
            ],
            out_specs=pl.BlockSpec((bn, tc, tl), lambda c, n, l, s: (n, c, l)),
        ),
        compiler_params=pltpu.CompilerParams(
            dimension_semantics=("parallel", "parallel", "parallel"),
            vmem_limit_bytes=_vmem_limit_bytes(2 * bn * tc * tl * itemsize,
                                               cap)),
        cost_estimate=pl.CostEstimate(
            flops=(6 if dropout_ratio > 0.0 else 4) * x3.size,
            transcendentals=0,
            bytes_accessed=2 * x3.size * itemsize + 1032 * n_chan),
    )(seed_arr, x3, s1, s2, gamma2, beta2)
    return out3.reshape(orig_shape)


# ---------------------------------------------------------------------------
# reference + demo
# ---------------------------------------------------------------------------
def _reference(x, gamma, beta, eps=1e-5):
    axes = (0,) + tuple(range(2, x.ndim))
    mean = jnp.mean(x, axis=axes, keepdims=True)
    var = jnp.mean((x - mean) ** 2, axis=axes, keepdims=True)
    g = gamma.reshape((1, -1) + (1,) * (x.ndim - 2))
    b = beta.reshape((1, -1) + (1,) * (x.ndim - 2))
    return jnp.maximum((x - mean) / jnp.sqrt(var + eps) * g + b, 0.0)


if __name__ == "__main__":
    key = jax.random.PRNGKey(0)
    kx, kg, kb, kx1 = jax.random.split(key, 4)

    # ConvMode.D2: NCHW input, BatchNorm2d(channels=4)
    N, C, H, W = 2, 4, 16, 16
    x = jax.random.normal(kx, (N, C, H, W), dtype=jnp.float32)
    gamma = 1.0 + 0.1 * jax.random.normal(kg, (C,), dtype=jnp.float32)
    beta = 0.1 * jax.random.normal(kb, (C,), dtype=jnp.float32)

    # --- BatchNorm + ReLU (dropout disabled) ---------------------------------
    out = jax.block_until_ready(
        regularization_layer(x, gamma, beta, do_batch_norm=True,
                             dropout_ratio=0.0))
    ref = _reference(x, gamma, beta)
    assert out.shape == x.shape
    assert float(jnp.max(jnp.abs(out - ref))) < 1e-4, "BN+ReLU mismatch"

    # --- do_batch_norm=False -> plain ReLU -----------------------------------
    out_relu = jax.block_until_ready(
        regularization_layer(x, gamma, beta, do_batch_norm=False,
                             dropout_ratio=0.0))
    assert float(jnp.max(jnp.abs(out_relu - jnp.maximum(x, 0.0)))) < 1e-6

    # --- ConvMode.D1: (N, C, L) input, BatchNorm1d ---------------------------
    x1 = jax.random.normal(kx1, (N, C, 8), dtype=jnp.float32)
    out1 = jax.block_until_ready(
        regularization_layer(x1, gamma, beta, do_batch_norm=True,
                             dropout_ratio=0.0))
    ref1 = _reference(x1, gamma, beta)
    assert float(jnp.max(jnp.abs(out1 - ref1))) < 1e-4, "BN1d mismatch"

    # --- dropout smoke test (training-mode inverted dropout) -----------------
    p = 0.5
    out_do = jax.block_until_ready(
        regularization_layer(x, gamma, beta, do_batch_norm=True,
                             dropout_ratio=p, seed=123))
    scaled_ref = ref / (1.0 - p)
    # survivors must equal ref/(1-p); dropped elements must be zero
    err = jnp.where(out_do != 0.0, jnp.abs(out_do - scaled_ref), 0.0)
    assert float(jnp.max(err)) < 1e-3, "dropout survivors mismatch"
    pos = ref > 0.0
    dropped = jnp.sum(pos & (out_do == 0.0)) / jnp.maximum(jnp.sum(pos), 1)
    assert 0.25 < float(dropped) < 0.75, "dropout rate far from p=0.5"

    print("KERNEL_OK")
</pallas_src>

<mosaic_0001>
module attributes {stable_mosaic.version = 11 : i64} {
  func.func @_fused_kernel(%arg0: i32, %arg1: memref<1xi32, #tpu.memory_space<smem>>, %arg2: memref<2x4x256xf32, #tpu.memory_space<vmem>>, %arg3: memref<4x1xf32, #tpu.memory_space<vmem>>, %arg4: memref<4x1xf32, #tpu.memory_space<vmem>>, %arg5: memref<2x4x256xf32, #tpu.memory_space<vmem>>) attributes {dimension_semantics = [#tpu.dimension_semantics<parallel>], iteration_bounds = array<i64: 1>, scalar_prefetch = 1 : i64, scratch_operands = 0 : i64, tpu.core_type = #tpu.core_type<tc>, window_params = [{transform_indices = @transform_0, window_bounds = array<i64: 2, 4, 256>}, {transform_indices = @transform_1, window_bounds = array<i64: 4, 1>}, {transform_indices = @transform_2, window_bounds = array<i64: 4, 1>}, {transform_indices = @transform_3, window_bounds = array<i64: 2, 4, 256>}]} {
    %c0 = arith.constant 0 : index
    %c0_0 = arith.constant 0 : index
    %c0_1 = arith.constant 0 : index
    %0 = vector.load %arg2[%c0, %c0_0, %c0_1] : memref<2x4x256xf32, #tpu.memory_space<vmem>>, vector<2x4x256xf32>
    %cst = arith.constant dense<0.000000e+00> : vector<4x256xf32>
    %1 = vector.multi_reduction <add>, %0, %cst [0] : vector<2x4x256xf32> to vector<4x256xf32>
    %cst_2 = arith.constant dense<0.000000e+00> : vector<4xf32>
    %2 = vector.multi_reduction <add>, %1, %cst_2 [1] : vector<4x256xf32> to vector<4xf32>
    %3 = vector.shape_cast %2 : vector<4xf32> to vector<4x1xf32>
    %4 = arith.mulf %0, %0 : vector<2x4x256xf32>
    %cst_3 = arith.constant dense<0.000000e+00> : vector<4x256xf32>
    %5 = vector.multi_reduction <add>, %4, %cst_3 [0] : vector<2x4x256xf32> to vector<4x256xf32>
    %cst_4 = arith.constant dense<0.000000e+00> : vector<4xf32>
    %6 = vector.multi_reduction <add>, %5, %cst_4 [1] : vector<4x256xf32> to vector<4xf32>
    %7 = vector.shape_cast %6 : vector<4xf32> to vector<4x1xf32>
    %cst_5 = arith.constant 0.001953125 : f32
    %8 = vector.broadcast %cst_5 : f32 to vector<4x1xf32>
    %9 = arith.mulf %3, %8 : vector<4x1xf32>
    %cst_6 = arith.constant 0.001953125 : f32
    %10 = vector.broadcast %cst_6 : f32 to vector<4x1xf32>
    %11 = arith.mulf %7, %10 : vector<4x1xf32>
    %12 = arith.mulf %9, %9 : vector<4x1xf32>
    %13 = arith.subf %11, %12 : vector<4x1xf32>
    %cst_7 = arith.constant 0.000000e+00 : f32
    %14 = vector.broadcast %cst_7 : f32 to vector<4x1xf32>
    %15 = arith.maximumf %13, %14 : vector<4x1xf32>
    %c0_8 = arith.constant 0 : index
    %c0_9 = arith.constant 0 : index
    %16 = vector.load %arg3[%c0_8, %c0_9] : memref<4x1xf32, #tpu.memory_space<vmem>>, vector<4x1xf32>
    %cst_10 = arith.constant 9.99999974E-6 : f32
    %17 = vector.broadcast %cst_10 : f32 to vector<4x1xf32>
    %18 = arith.addf %15, %17 : vector<4x1xf32>
    %19 = math.rsqrt %18 : vector<4x1xf32>
    %20 = arith.mulf %16, %19 : vector<4x1xf32>
    %c0_11 = arith.constant 0 : index
    %c0_12 = arith.constant 0 : index
    %21 = vector.load %arg4[%c0_11, %c0_12] : memref<4x1xf32, #tpu.memory_space<vmem>>, vector<4x1xf32>
    %22 = arith.mulf %9, %20 : vector<4x1xf32>
    %23 = arith.subf %21, %22 : vector<4x1xf32>
    %24 = vector.shape_cast %20 : vector<4x1xf32> to vector<1x4x1xf32>
    %25 = vector.broadcast %24 : vector<1x4x1xf32> to vector<2x4x256xf32>
    %26 = arith.mulf %0, %25 : vector<2x4x256xf32>
    %27 = vector.shape_cast %23 : vector<4x1xf32> to vector<1x4x1xf32>
    %28 = vector.broadcast %27 : vector<1x4x1xf32> to vector<2x4x256xf32>
    %29 = arith.addf %26, %28 : vector<2x4x256xf32>
    %cst_13 = arith.constant 0.000000e+00 : f32
    %30 = vector.broadcast %cst_13 : f32 to vector<2x4x256xf32>
    %31 = arith.maximumf %29, %30 : vector<2x4x256xf32>
    %c0_14 = arith.constant 0 : index
    %c0_15 = arith.constant 0 : index
    %c0_16 = arith.constant 0 : index
    %32 = vector.load %arg5[%c0_14, %c0_15, %c0_16] : memref<2x4x256xf32, #tpu.memory_space<vmem>>, vector<2x4x256xf32>
    tpu.vector_store %arg5[%c0_14, %c0_15, %c0_16], %31 {strides = array<i32>} : memref<2x4x256xf32, #tpu.memory_space<vmem>>, vector<2x4x256xf32>,
    return
  }
  func.func @transform_0(%arg0: i32, %arg1: memref<1xi32, #tpu.memory_space<smem>>) -> (i32, i32, i32) {
    %c0_i32 = arith.constant 0 : i32
    %c0_i32_0 = arith.constant 0 : i32
    %c0_i32_1 = arith.constant 0 : i32
    return %c0_i32, %arg0, %c0_i32_0 : i32, i32, i32
  }
  func.func @transform_1(%arg0: i32, %arg1: memref<1xi32, #tpu.memory_space<smem>>) -> (i32, i32) {
    %c0_i32 = arith.constant 0 : i32
    %c0_i32_0 = arith.constant 0 : i32
    return %arg0, %c0_i32 : i32, i32
  }
  func.func @transform_2(%arg0: i32, %arg1: memref<1xi32, #tpu.memory_space<smem>>) -> (i32, i32) {
    %c0_i32 = arith.constant 0 : i32
    %c0_i32_0 = arith.constant 0 : i32
    return %arg0, %c0_i32 : i32, i32
  }
  func.func @transform_3(%arg0: i32, %arg1: memref<1xi32, #tpu.memory_space<smem>>) -> (i32, i32, i32) {
    %c0_i32 = arith.constant 0 : i32
    %c0_i32_0 = arith.constant 0 : i32
    %c0_i32_1 = arith.constant 0 : i32
    return %c0_i32, %arg0, %c0_i32_0 : i32, i32, i32
  }
}

</mosaic_0001>

<llo_original>
// kernel: tpu_custom_call.1
$region0: #{tpu_custom_call.1}
  #allocation0 [shape = 'u32[]', space=smem, size = 0x4, offset = 0x4, fixed_abs, tag = 'smem constant byte address 0x4 - core index']
  #allocation1 [shape = 'u32[144,128]{1,0:T(1,128)}', space=vmem, size = 0x12000, scoped, tag = 'internal scratch']
  #allocation2 [shape = 's32[1]{0}', space=sflag, size = 0x4, scoped, tag = 'scoped memory for tpu_custom_call.1']
  #allocation3 [shape = 's32[1]{0:T(128)S(6)}', space=smem, size = 0x200, scoped, tag = 'prefetched SMEM operand 0']
  %s0 = inlined_call_operand.<no memory space> [shape: s32[1], index: 0, kind: input, shape index: {}]
  %s1 = inlined_call_operand.hbm [shape: f32[2,4,256], index: 1, kind: input, shape index: {}]
  %s2 = inlined_call_operand.vmem [shape: f32[4,1], index: 2, kind: input, shape index: {}]
  %s3 = inlined_call_operand.vmem [shape: f32[4,1], index: 3, kind: input, shape index: {}]
  %s4 = inlined_call_operand.hbm [shape: f32[2,4,256], index: 4, kind: output, shape index: {}]
  %s5 = sld [smem:[#allocation0]]
  $region26: #{tpu_custom_call.1} parent=0
    _
  %s7 = ssub.s32 1, %s5
  %s8 = scalar_select 0, %s7, %s5
  %9 = sst [smem:[#allocation3]] %s0
  $region1: #{tpu_custom_call.1} parent=0
    #allocation4 [shape = 'u8[8192]{0}', space=vmem, size = 0x2000, scoped, tag = 'input window, operand 1, single buffered']
    #allocation5 [shape = 's32[1]{0}', space=sflag, size = 0x4, scoped, tag = 'scoped memory for tpu_custom_call.1']
    #allocation6 [shape = 's32[1]{0}', space=sflag, size = 0x4, scoped, tag = 'scoped memory for tpu_custom_call.1']
    #allocation7 [shape = 'u8[8192]{0}', space=vmem, size = 0x2000, scoped, tag = 'output window, operand 0, single buffered']
    %10 = vsyncpa [#allocation5], 0
    %11 = vsyncpa [#allocation6], 0
    // Predicated region
    $region2: #{tpu_custom_call.1} parent=1 // pred_check
      _
    $region3: #{tpu_custom_call.1} parent=1 // pred_check_branch
      %13 = sbr.rel (0) target = $region5
    $region4: #{tpu_custom_call.1} parent=1 // pred_region
      %s15 = ssub.s32 256, 256
      %16 = vsyncadd [#allocation5], %s15
      %s17 = sshll.u32 [#allocation4], 4
      %s18 = int_to_ptr.vmem [resolvable:$true] %s17
      %23 = dma.hbm_to_vmem [thread:$0]  %s1, 256, %s18, [#allocation5], 128, 128, 8
    $region5: #{tpu_custom_call.1} parent=1 // pred_fallthru
      _
    // Predicated region
    $region6: #{tpu_custom_call.1} parent=1 // pred_check
      _
    $region7: #{tpu_custom_call.1} parent=1 // pred_check_branch
      %25 = sbr.rel (0) target = $region9
    $region8: #{tpu_custom_call.1} parent=1 // pred_region
      _
    $region9: #{tpu_custom_call.1} parent=1 // pred_fallthru
      _
    // Predicated region
    $region10: #{tpu_custom_call.1} parent=1 // pred_check
      _
    $region11: #{tpu_custom_call.1} parent=1 // pred_check_branch
      %27 = sbr.rel (0) target = $region13
    $region12: #{tpu_custom_call.1} parent=1 // pred_region
      _
    $region13: #{tpu_custom_call.1} parent=1 // pred_fallthru
      _
    // Predicated region
    $region14: #{tpu_custom_call.1} parent=1 // pred_check
      _
    $region15: #{tpu_custom_call.1} parent=1 // pred_check_branch
      %29 = sbr.rel (0) target = $region17
    $region16: #{tpu_custom_call.1} parent=1 // pred_region
      %30 = dma.done [#allocation5], 256
    $region17: #{tpu_custom_call.1} parent=1 // pred_fallthru
      _
    %v31 = vld [vmem:[#allocation4] sm:$0xff]
    %v32 = vld [vmem:[#allocation4 + $0x8] sm:$0xff]
    %v35 = vcombine.high %v31, %v31
    %v36 = vcombine.high %v32, %v32
    %vm39 = vcmask 1043456
    %v40 = vsel %vm39, %v31, 0.0
    %v41 = vsel %vm39, %v32, 0.0
    %v42 = vadd.f32 %v40, %v41
    %v43 = vsel %vm39, %v35, 0.0
    %v44 = vsel %vm39, %v36, 0.0
    %v45 = vadd.f32 %v43, %v44
    %v46 = vsel %vm39, %v42, 0.0
    %v47 = vsel %vm39, %v45, 0.0
    %v48 = vadd.f32 %v46, %v47
    %49 = vadd.xlane.f32.xlu0 %v48
    %v50 = vpop.xlane.xlu0 %49
    %v51 = vmul.f32 %v31, %v31
    %v52 = vmul.f32 %v32, %v32
    %v55 = vcombine.high %v51, %v51
    %v56 = vcombine.high %v52, %v52
    %v59 = vsel %vm39, %v51, 0.0
    %v60 = vsel %vm39, %v52, 0.0
    %v61 = vadd.f32 %v59, %v60
    %v62 = vsel %vm39, %v55, 0.0
    %v63 = vsel %vm39, %v56, 0.0
    %v64 = vadd.f32 %v62, %v63
    %v65 = vsel %vm39, %v61, 0.0
    %v66 = vsel %vm39, %v64, 0.0
    %v67 = vadd.f32 %v65, %v66
    %68 = vadd.xlane.f32.xlu0 %v67
    %v69 = vpop.xlane.xlu0 %68
    %v70 = vmul.f32 %v50, 0.001953125
    %v71 = vmul.f32 %v69, 0.001953125
    %v72 = vmul.f32 %v70, %v70
    %v73 = vsub.f32 %v71, %v72
    %v74 = vmax.f32 %v73, 0.0
    %v75 = vld [vmem:[%s2] sm:$0xf]
    %v76 = vadd.f32 %v74, 1e-05
    %v77 = vrsqrt.pop %v76
    %v78 = vmul.f32 %v75, %v77
    %v79 = vld [vmem:[%s3] sm:$0xf]
    %v80 = vmul.f32 %v70, %v78
    %v81 = vsub.f32 %v79, %v80
    %83 = vset.pattern.permute.xlu0 0
    %84 = vperm.xlu0 %83, %v78
    %v85 = vpop.permute.xlu0 %84
    %v87 = vunpack.c.l.s4 839922192
    %v88 = vunpack.c.0.s8 %v87
    %v89 = vlaneseq
    %v90 = vshrl.u32 %v89, 7
    %v91 = vsub.s32 %v88, %v90
    %v92 = vrot.slane %v85, %v91
    %v94 = vmul.f32 %v31, %v92
    %v95 = vmul.f32 %v32, %v92
    %97 = vset.pattern.permute.xlu0 0
    %98 = vperm.xlu0 %97, %v81
    %v99 = vpop.permute.xlu0 %98
    %v101 = vunpack.c.l.s4 839922192
    %v102 = vunpack.c.0.s8 %v101
    %v103 = vlaneseq
    %v104 = vshrl.u32 %v103, 7
    %v105 = vsub.s32 %v102, %v104
    %v106 = vrot.slane %v99, %v105
    %v108 = vadd.f32 %v94, %v106
    %v109 = vadd.f32 %v95, %v106
    %v110 = vmax.f32 %v108, 0.0
    %v111 = vmax.f32 %v109, 0.0
    %112 = vst [vmem:[#allocation7] sm:$0xff] %v110
    %113 = vst [vmem:[#allocation7 + $0x8] sm:$0xff] %v111
    // Predicated region
    $region18: #{tpu_custom_call.1} parent=1 // pred_check
      _
    $region19: #{tpu_custom_call.1} parent=1 // pred_check_branch
      %115 = sbr.rel (0) target = $region21
    $region20: #{tpu_custom_call.1} parent=1 // pred_region
      %s117 = ssub.s32 256, 256
      %118 = vsyncadd [#allocation6], %s117
      %s119 = sshll.u32 [#allocation7], 4
      %s120 = int_to_ptr.vmem [resolvable:$true] %s119
      %125 = dma.vmem_to_hbm [thread:$0]  %s120, 256, %s4, [#allocation6], 128, 128, 8
    $region21: #{tpu_custom_call.1} parent=1 // pred_fallthru
      _
    // Predicated region
    $region22: #{tpu_custom_call.1} parent=1 // pred_check
      _
    $region23: #{tpu_custom_call.1} parent=1 // pred_check_branch
      %127 = sbr.rel (0) target = $region25
    $region24: #{tpu_custom_call.1} parent=1 // pred_region
      %128 = dma.done [#allocation6], 256
    $region25: #{tpu_custom_call.1} parent=1 // pred_fallthru
      _
    %129 = vsyncpa [#allocation5], 1
    %130 = vsyncpa [#allocation6], 1

</llo_original>
